<compile_context>
chip_gen: v7x
topology: tpu7x:2x2x1
jax: 0.10.0
libtpu: 0.0.40
codegen_flags: <defaults>
</compile_context>

<pallas_src>
import functools

import numpy as np
import jax
import jax.numpy as jnp
from jax.experimental import pallas as pl
from jax.experimental.pallas import tpu as pltpu

EPS = 1e-5  # PyTorch nn.LayerNorm default eps


# ----------------------------------------------------------------------------
# Generation-aware VMEM budget
# ----------------------------------------------------------------------------
def _vmem_limit_bytes():
    cap = 64 * 1024 * 1024                       # conservative fallback (v7x physical)
    try:
        cap = int(pltpu.get_tpu_info().vmem_capacity_bytes)
    except Exception:
        pass
    return int(cap * 0.85)                       # ~54 MiB v7x, ~111 MiB v5e/v6e


def _choose_batch_tile(N, S, D, hid, num_heads, vmem_limit):
    """Largest divisor Bt of N that fits the VMEM budget and keeps N//Bt >= 2
    (so v7x's two TensorCores both get work on the 'parallel' batch axis)."""
    # double-buffered per-layer bf16 matmul weights
    w_bytes = 2 * 2 * (3 * D * D + D * D + 2 * D * hid)
    # per batch element: resident f32 activations, double-buffered in/out blocks,
    # qkv / mlp-hidden intermediates and per-head (S, S) scores (all f32).
    per_elem = 4 * S * (5 * D + 3 * D + hid + num_heads * S)
    budget = int(vmem_limit * 0.7) - w_bytes
    cap = max(1, budget // per_elem) if budget > per_elem else 1
    bt = 1
    for cand in range(1, N + 1):
        if N % cand == 0 and cand <= cap and (N // cand >= 2 or N == 1):
            bt = cand
    return bt


# ----------------------------------------------------------------------------
# In-kernel helpers
# ----------------------------------------------------------------------------
def _layernorm(x, w, b):
    mu = jnp.mean(x, axis=-1, keepdims=True)
    xc = x - mu
    var = jnp.mean(xc * xc, axis=-1, keepdims=True)   # biased variance (torch semantics)
    return xc * jax.lax.rsqrt(var + EPS) * w + b


# ----------------------------------------------------------------------------
# Patch embed: tiled linear with fused pos-embed add
# ----------------------------------------------------------------------------
def patch_embed_kernel(x_ref, w_ref, b_ref, pe_ref, o_ref):
    o_ref[...] = (
        jnp.dot(x_ref[...], w_ref[...], preferred_element_type=jnp.float32)
        + b_ref[...] + pe_ref[...]
    )


def pallas_patch_embed(patches, w, b, pos_embed, *, tl=512):
    """(N, L, K) f32 @ (K, D) bf16 + b + pos_embed[l]  ->  (N, L, D) f32.

    The full weight stays resident in VMEM (small at ViT sizes); the grid only
    runs over rows so the weight is DMA'd once, and the pos-embed add is fused
    into the epilogue instead of being a separate HBM read/write pass."""
    N, L, K = patches.shape
    D = w.shape[1]
    tl = L if L <= tl else tl                    # 512 is a multiple of 8 -> valid tile
    grid = (N, pl.cdiv(L, tl))
    return pl.pallas_call(
        patch_embed_kernel,
        grid=grid,
        out_shape=jax.ShapeDtypeStruct((N, L, D), jnp.float32),
        in_specs=[
            pl.BlockSpec((None, tl, K), lambda n, j: (n, j, 0)),
            pl.BlockSpec((K, D), lambda n, j: (0, 0)),       # resident weight
            pl.BlockSpec((1, D), lambda n, j: (0, 0)),
            pl.BlockSpec((tl, D), lambda n, j: (j, 0)),       # pos-embed rows
        ],
        out_specs=pl.BlockSpec((None, tl, D), lambda n, j: (n, j, 0)),
        compiler_params=pltpu.CompilerParams(
            dimension_semantics=("parallel", "parallel"),
            vmem_limit_bytes=_vmem_limit_bytes()),
    )(patches.astype(jnp.bfloat16), w, b, pos_embed)


# ----------------------------------------------------------------------------
# Fused transformer stack: all `depth` ViT blocks + final LayerNorm in one call
# ----------------------------------------------------------------------------
def encoder_blocks_kernel(x_ref, ln1w_ref, ln1b_ref, qkvw_ref, qkvb_ref,
                          projw_ref, projb_ref, ln2w_ref, ln2b_ref,
                          fc1w_ref, fc1b_ref, fc2w_ref, fc2b_ref,
                          normw_ref, normb_ref, o_ref, x_scr,
                          *, num_heads, s_real):
    """grid = (batch_tiles, depth).  A (Bt, S, D) activation tile lives in the VMEM
    scratch across the depth axis; layer weights are indexed by the depth grid axis
    so layer l+1 weights are prefetched while layer l computes.  Dense matmuls run
    on the flattened (Bt*S, D) activations for MXU fill and Bt-fold weight-DMA
    amortization.  Final LayerNorm is applied on the last depth step."""
    l = pl.program_id(1)

    @pl.when(l == 0)
    def _():
        x_scr[...] = x_ref[...]                   # load activations once per batch tile

    x = x_scr[...]                                # (Bt, S, D) f32 resident activations
    Bt, S, D = x.shape
    H = num_heads
    dh = D // H
    M = Bt * S

    # ---------------- attention branch (pre-LN MHSA, heads x batch on the MXU) ------
    h = _layernorm(x, ln1w_ref[...], ln1b_ref[...])
    qkv = (jnp.dot(h.reshape(M, D).astype(jnp.bfloat16), qkvw_ref[...],
                   preferred_element_type=jnp.float32) + qkvb_ref[...])      # (M, 3D)

    def split_heads(cols):                        # (M, D) -> (H*Bt, S, dh)
        t = cols.reshape(M, H, dh)                # split lanes into heads
        t = jnp.swapaxes(t, 0, 1)                 # (H, M, dh)
        return t.reshape(H * Bt, S, dh)           # split rows; group g = h*Bt + b

    # scale folded into q once (cheaper than scaling the (G, S, S) score matrix)
    qh = split_heads(qkv[:, 0:D] * (dh ** -0.5)).astype(jnp.bfloat16)
    kh = split_heads(qkv[:, D:2 * D]).astype(jnp.bfloat16)
    vh = split_heads(qkv[:, 2 * D:3 * D]).astype(jnp.bfloat16)

    # TODO(synk): Mosaic dot_general is only exercised here with a single leading
    # batch dim; a two-batch-dim 'bqhd,bkhd->bhqk' form would drop the (1,0,2)
    # head transposes entirely if/when supported.
    att = jnp.einsum('gqd,gkd->gqk', qh, kh,
                     preferred_element_type=jnp.float32)                     # (G, S, S)
    if s_real < S:                                # mask padded key columns
        kid = jax.lax.broadcasted_iota(jnp.int32, (1, 1, S), 2)
        att = att + jnp.where(kid < s_real, 0.0, -1e30)
    att = att - jnp.max(att, axis=-1, keepdims=True)
    p = jnp.exp(att)
    p = p * pl.reciprocal(jnp.sum(p, axis=-1, keepdims=True), approx=True)
    ctx = jnp.einsum('gqk,gkd->gqd', p.astype(jnp.bfloat16), vh,
                     preferred_element_type=jnp.float32)                     # (G, S, dh)
    attn_out = jnp.swapaxes(ctx.reshape(H, M, dh), 0, 1).reshape(M, D)       # (M, D)
    attn_out = (jnp.dot(attn_out.astype(jnp.bfloat16), projw_ref[...],
                        preferred_element_type=jnp.float32) + projb_ref[...])
    x = x + attn_out.reshape(Bt, S, D)

    # ---------------- MLP branch (pre-LN) ----------------
    h2 = _layernorm(x, ln2w_ref[...], ln2b_ref[...])
    h2 = (jnp.dot(h2.reshape(M, D).astype(jnp.bfloat16), fc1w_ref[...],
                  preferred_element_type=jnp.float32) + fc1b_ref[...])
    # TODO(synk): PyTorch nn.GELU defaults to exact erf GELU; tanh approximation used here.
    h2 = jax.nn.gelu(h2, approximate=True)
    h2 = (jnp.dot(h2.astype(jnp.bfloat16), fc2w_ref[...],
                  preferred_element_type=jnp.float32) + fc2b_ref[...])
    x = x + h2.reshape(Bt, S, D)

    x_scr[...] = x                                # carry to next layer

    @pl.when(l == pl.num_programs(1) - 1)
    def _():
        # fused final LayerNorm; output block is flushed once per batch tile.
        o_ref[...] = _layernorm(x, normw_ref[...], normb_ref[...])


def pallas_encoder_blocks(x, blk, norm_w, norm_b, *, num_heads, s_real):
    N, S, D = x.shape
    depth = blk['qkv_w'].shape[0]
    hid = blk['fc1_w'].shape[-1]
    vmem_limit = _vmem_limit_bytes()
    bt = _choose_batch_tile(N, S, D, hid, num_heads, vmem_limit)

    kern = functools.partial(encoder_blocks_kernel, num_heads=num_heads, s_real=s_real)

    def lspec(shape):        # per-layer weight, indexed by the depth grid axis
        nd = len(shape)
        return pl.BlockSpec((None,) + tuple(shape),
                            lambda b, l, _nd=nd: (l,) + (0,) * _nd)

    def cspec(shape):        # constant weights (final norm)
        nd = len(shape)
        return pl.BlockSpec(tuple(shape), lambda b, l, _nd=nd: (0,) * _nd)

    # TODO(synk): for ViT-L (D=1024) on v7x (64 MiB VMEM) fc1_w/fc2_w should additionally
    # be tiled over the 4*D hidden axis (extra "arbitrary" grid axis + accumulator) so the
    # double-buffered weight tiles stay within budget; unnecessary at these sizes.
    return pl.pallas_call(
        kern,
        grid=(N // bt, depth),
        out_shape=jax.ShapeDtypeStruct((N, S, D), jnp.float32),
        in_specs=[
            pl.BlockSpec((bt, S, D), lambda b, l: (b, 0, 0)),     # x (read at l==0)
            lspec((1, D)), lspec((1, D)),                         # ln1
            lspec((D, 3 * D)), lspec((1, 3 * D)),                 # qkv
            lspec((D, D)), lspec((1, D)),                         # proj
            lspec((1, D)), lspec((1, D)),                         # ln2
            lspec((D, hid)), lspec((1, hid)),                     # fc1
            lspec((hid, D)), lspec((1, D)),                       # fc2
            cspec((1, D)), cspec((1, D)),                         # final norm
        ],
        out_specs=pl.BlockSpec((bt, S, D), lambda b, l: (b, 0, 0)),
        scratch_shapes=[pltpu.VMEM((bt, S, D), jnp.float32)],     # resident activations
        compiler_params=pltpu.CompilerParams(
            dimension_semantics=("parallel", "arbitrary"),
            vmem_limit_bytes=vmem_limit),
    )(x, blk['ln1_w'], blk['ln1_b'], blk['qkv_w'], blk['qkv_b'],
      blk['proj_w'], blk['proj_b'], blk['ln2_w'], blk['ln2_b'],
      blk['fc1_w'], blk['fc1_b'], blk['fc2_w'], blk['fc2_b'],
      norm_w, norm_b)


# ----------------------------------------------------------------------------
# Parameter construction (deterministic, mirrors initialize_weights())
# ----------------------------------------------------------------------------
def get_2d_sincos_pos_embed(embed_dim, grid_size, cls_token=True):
    def get_1d(dim, pos):
        omega = np.arange(dim // 2, dtype=np.float64) / (dim / 2.0)
        omega = 1.0 / 10000 ** omega
        pos = pos.reshape(-1)
        out = np.einsum('m,d->md', pos, omega)
        return np.concatenate([np.sin(out), np.cos(out)], axis=1)

    grid_h = np.arange(grid_size, dtype=np.float32)
    grid_w = np.arange(grid_size, dtype=np.float32)
    grid = np.meshgrid(grid_w, grid_h)               # w goes first (MAE convention)
    grid = np.stack(grid, axis=0).reshape([2, 1, grid_size, grid_size])
    emb_h = get_1d(embed_dim // 2, grid[0])
    emb_w = get_1d(embed_dim // 2, grid[1])
    emb = np.concatenate([emb_h, emb_w], axis=1)
    if cls_token:
        emb = np.concatenate([np.zeros([1, embed_dim]), emb], axis=0)
    return emb.astype(np.float32)


def xavier_uniform(key, shape, fan_in, fan_out):
    bound = float(np.sqrt(6.0 / (fan_in + fan_out)))
    return jax.random.uniform(key, shape, jnp.float32, -bound, bound)


def init_params(key, *, in_chans, patch_size, embed_dim, depth, num_heads,
                mlp_ratio, num_patches):
    D = embed_dim
    hid = int(D * mlp_ratio)
    kdim = in_chans * patch_size * patch_size
    keys = jax.random.split(key, 2 + depth)

    params = {}
    # patch_embed.proj: Conv2d weight (D, C, p, p), stored transposed as (C*p*p, D), bf16.
    params['patch_w'] = xavier_uniform(keys[0], (kdim, D), kdim, D).astype(jnp.bfloat16)
    params['patch_b'] = jnp.zeros((1, D), jnp.float32)
    params['cls_token'] = 0.02 * jax.random.normal(keys[1], (1, 1, D), jnp.float32)
    pe = get_2d_sincos_pos_embed(D, int(num_patches ** 0.5), cls_token=True)
    params['pos_embed'] = jnp.asarray(pe)[None]      # (1, L+1, D), frozen

    bkeys = [jax.random.split(keys[2 + i], 4) for i in range(depth)]

    def stack(fn):
        return jnp.stack([fn(i) for i in range(depth)], axis=0)

    # Per-layer weights stacked on a leading depth axis (indexed by the depth grid axis).
    # Matmul weights stored bf16 (MXU native); LN weights and biases kept f32.
    params['blocks'] = dict(
        ln1_w=jnp.ones((depth, 1, D), jnp.float32),
        ln1_b=jnp.zeros((depth, 1, D), jnp.float32),
        qkv_w=stack(lambda i: xavier_uniform(bkeys[i][0], (D, 3 * D), D, 3 * D)
                    ).astype(jnp.bfloat16),
        qkv_b=jnp.zeros((depth, 1, 3 * D), jnp.float32),
        proj_w=stack(lambda i: xavier_uniform(bkeys[i][1], (D, D), D, D)
                     ).astype(jnp.bfloat16),
        proj_b=jnp.zeros((depth, 1, D), jnp.float32),
        ln2_w=jnp.ones((depth, 1, D), jnp.float32),
        ln2_b=jnp.zeros((depth, 1, D), jnp.float32),
        fc1_w=stack(lambda i: xavier_uniform(bkeys[i][2], (D, hid), D, hid)
                    ).astype(jnp.bfloat16),
        fc1_b=jnp.zeros((depth, 1, hid), jnp.float32),
        fc2_w=stack(lambda i: xavier_uniform(bkeys[i][3], (hid, D), hid, D)
                    ).astype(jnp.bfloat16),
        fc2_b=jnp.zeros((depth, 1, D), jnp.float32),
    )
    params['norm_w'] = jnp.ones((1, D), jnp.float32)
    params['norm_b'] = jnp.zeros((1, D), jnp.float32)
    return params


# ----------------------------------------------------------------------------
# Forward pass (glue in JAX, hot path in Pallas)
# ----------------------------------------------------------------------------
def patchify_conv_input(imgs, p):
    """(N, C, H, W) -> (N, L, C*p*p), flatten order (c, ph, pw) == Conv2d weight layout."""
    N, C, H, W = imgs.shape
    h, w = H // p, W // p
    x = imgs.reshape(N, C, h, p, w, p)
    x = jnp.transpose(x, (0, 2, 4, 1, 3, 5))         # N h w C p p
    return x.reshape(N, h * w, C * p * p)


def mae_encoder_forward(imgs, params, *, mask_ratio, patch_size, num_heads, noise_key,
                        remove_class_token=True):
    N = imgs.shape[0]
    D = params['patch_w'].shape[1]

    # --- patch embed (Conv2d stride=patch == patchify + matmul) with fused pos-embed ---
    patches = patchify_conv_input(imgs, patch_size)          # (N, L, K)
    L = patches.shape[1]
    x = pallas_patch_embed(patches, params['patch_w'], params['patch_b'],
                           params['pos_embed'][0, 1:, :])    # (N, L, D)

    # --- random masking (data-dependent argsort/gather: plain-JAX glue) ---
    len_keep = int(L * (1.0 - mask_ratio))
    noise = jax.random.uniform(noise_key, (N, L))             # torch.rand analogue
    ids_shuffle = jnp.argsort(noise, axis=1)
    ids_restore = jnp.argsort(ids_shuffle, axis=1)
    ids_keep = ids_shuffle[:, :len_keep]
    x_masked = jnp.take_along_axis(x, ids_keep[:, :, None], axis=1)
    mask0 = jnp.concatenate(
        [jnp.zeros((N, len_keep), jnp.float32), jnp.ones((N, L - len_keep), jnp.float32)],
        axis=1)
    mask = jnp.take_along_axis(mask0, ids_restore, axis=1)

    # --- prepend cls token ---
    cls = params['cls_token'] + params['pos_embed'][:, :1, :]
    cls = jnp.broadcast_to(cls, (N, 1, D))
    x = jnp.concatenate([cls, x_masked], axis=1)              # (N, S_real, D)

    # --- pad the token axis to a sublane multiple; padded keys masked in-kernel ---
    s_real = x.shape[1]
    s_pad = -(-s_real // 8) * 8
    if s_pad != s_real:
        x = jnp.pad(x, ((0, 0), (0, s_pad - s_real), (0, 0)))

    # --- all transformer blocks + final LayerNorm fused in one Pallas call ---
    x = pallas_encoder_blocks(x, params['blocks'], params['norm_w'], params['norm_b'],
                              num_heads=num_heads, s_real=s_real)
    x = x[:, :s_real, :]

    if remove_class_token:
        x = x[:, 1:, :]
    return x, mask, ids_restore, ids_keep


# ----------------------------------------------------------------------------
if __name__ == "__main__":
    key = jax.random.PRNGKey(0)
    pkey, xkey, nkey = jax.random.split(key, 3)

    # Small-shape config consistent with the module (scaled-down ViT).
    img_size, patch_size, in_chans = 16, 4, 3
    embed_dim, depth, num_heads, mlp_ratio = 32, 2, 4, 4.0
    mask_ratio = 0.75
    num_patches = (img_size // patch_size) ** 2               # 16

    params = init_params(pkey, in_chans=in_chans, patch_size=patch_size,
                         embed_dim=embed_dim, depth=depth, num_heads=num_heads,
                         mlp_ratio=mlp_ratio, num_patches=num_patches)

    imgs = jax.random.normal(xkey, (2, in_chans, img_size, img_size), jnp.float32)

    latent, mask, ids_restore, ids_keep = mae_encoder_forward(
        imgs, params, mask_ratio=mask_ratio, patch_size=patch_size,
        num_heads=num_heads, noise_key=nkey)

    jax.block_until_ready((latent, mask, ids_restore, ids_keep))

    len_keep = int(num_patches * (1.0 - mask_ratio))
    assert latent.shape == (2, len_keep, embed_dim)
    assert mask.shape == (2, num_patches)
    assert ids_restore.shape == (2, num_patches)
    assert ids_keep.shape == (2, len_keep)
    assert bool(jnp.all(jnp.isfinite(latent)))
    print("KERNEL_OK")
</pallas_src>

<mosaic_0001>
module attributes {stable_mosaic.version = 11 : i64} {
  func.func @patch_embed_kernel(%arg0: i32, %arg1: i32, %arg2: memref<1x16x48xbf16, #tpu.memory_space<vmem>>, %arg3: memref<48x32xbf16, #tpu.memory_space<vmem>>, %arg4: memref<1x32xf32, #tpu.memory_space<vmem>>, %arg5: memref<16x32xf32, #tpu.memory_space<vmem>>, %arg6: memref<1x16x32xf32, #tpu.memory_space<vmem>>) attributes {dimension_semantics = [#tpu.dimension_semantics<parallel>, #tpu.dimension_semantics<parallel>], iteration_bounds = array<i64: 2, 1>, scalar_prefetch = 0 : i64, scratch_operands = 0 : i64, tpu.core_type = #tpu.core_type<tc>, window_params = [{transform_indices = @transform_0, window_bounds = array<i64: 1, 16, 48>}, {pipeline_mode = #tpu.pipeline_mode<synchronous>, transform_indices = @transform_1, window_bounds = array<i64: 48, 32>}, {pipeline_mode = #tpu.pipeline_mode<synchronous>, transform_indices = @transform_2, window_bounds = array<i64: 1, 32>}, {transform_indices = @transform_3, window_bounds = array<i64: 16, 32>}, {transform_indices = @transform_4, window_bounds = array<i64: 1, 16, 32>}]} {
    %c0 = arith.constant 0 : index
    %c0_0 = arith.constant 0 : index
    %c0_1 = arith.constant 0 : index
    %0 = vector.load %arg2[%c0, %c0_0, %c0_1] : memref<1x16x48xbf16, #tpu.memory_space<vmem>>, vector<1x16x48xbf16>
    %1 = vector.shape_cast %0 : vector<1x16x48xbf16> to vector<16x48xbf16>
    %c0_2 = arith.constant 0 : index
    %c0_3 = arith.constant 0 : index
    %2 = vector.load %arg3[%c0_2, %c0_3] : memref<48x32xbf16, #tpu.memory_space<vmem>>, vector<48x32xbf16>
    %cst = arith.constant dense<0.000000e+00> : vector<16x32xf32>
    %3 = tpu.matmul %1, %2, %cst {dimension_numbers = #tpu.dot_dimension_numbers<[1], [0], [0], [1], [0, 0, 1, 1], [], []>} : vector<16x48xbf16>, vector<48x32xbf16>, vector<16x32xf32> -> vector<16x32xf32>
    %c0_4 = arith.constant 0 : index
    %c0_5 = arith.constant 0 : index
    %4 = vector.load %arg4[%c0_4, %c0_5] : memref<1x32xf32, #tpu.memory_space<vmem>>, vector<1x32xf32>
    %5 = vector.broadcast %4 : vector<1x32xf32> to vector<16x32xf32>
    %6 = arith.addf %3, %5 : vector<16x32xf32>
    %c0_6 = arith.constant 0 : index
    %c0_7 = arith.constant 0 : index
    %7 = vector.load %arg5[%c0_6, %c0_7] : memref<16x32xf32, #tpu.memory_space<vmem>>, vector<16x32xf32>
    %8 = arith.addf %6, %7 : vector<16x32xf32>
    %c0_8 = arith.constant 0 : index
    %c0_9 = arith.constant 0 : index
    %c0_10 = arith.constant 0 : index
    %9 = vector.load %arg6[%c0_8, %c0_9, %c0_10] : memref<1x16x32xf32, #tpu.memory_space<vmem>>, vector<1x16x32xf32>
    %10 = vector.shape_cast %9 : vector<1x16x32xf32> to vector<16x32xf32>
    %11 = vector.shape_cast %8 : vector<16x32xf32> to vector<1x16x32xf32>
    tpu.vector_store %arg6[%c0_8, %c0_9, %c0_10], %11 {strides = array<i32>} : memref<1x16x32xf32, #tpu.memory_space<vmem>>, vector<1x16x32xf32>,
    return
  }
  func.func @transform_0(%arg0: i32, %arg1: i32) -> (i32, i32, i32) {
    %c0_i32 = arith.constant 0 : i32
    %c0_i32_0 = arith.constant 0 : i32
    return %arg0, %arg1, %c0_i32 : i32, i32, i32
  }
  func.func @transform_1(%arg0: i32, %arg1: i32) -> (i32, i32) {
    %c0_i32 = arith.constant 0 : i32
    %c0_i32_0 = arith.constant 0 : i32
    %c0_i32_1 = arith.constant 0 : i32
    return %c0_i32, %c0_i32_0 : i32, i32
  }
  func.func @transform_2(%arg0: i32, %arg1: i32) -> (i32, i32) {
    %c0_i32 = arith.constant 0 : i32
    %c0_i32_0 = arith.constant 0 : i32
    %c0_i32_1 = arith.constant 0 : i32
    return %c0_i32, %c0_i32_0 : i32, i32
  }
  func.func @transform_3(%arg0: i32, %arg1: i32) -> (i32, i32) {
    %c0_i32 = arith.constant 0 : i32
    %c0_i32_0 = arith.constant 0 : i32
    return %arg1, %c0_i32 : i32, i32
  }
  func.func @transform_4(%arg0: i32, %arg1: i32) -> (i32, i32, i32) {
    %c0_i32 = arith.constant 0 : i32
    %c0_i32_0 = arith.constant 0 : i32
    return %arg0, %arg1, %c0_i32 : i32, i32, i32
  }
}

</mosaic_0001>

<llo_original>
// kernel: tpu_custom_call.1
$region0: #{tpu_custom_call.1}
  #allocation0 [shape = 'u32[]', space=smem, size = 0x4, offset = 0x4, fixed_abs, tag = 'smem constant byte address 0x4 - core index']
  #allocation1 [shape = 'u32[144,128]{1,0:T(1,128)}', space=vmem, size = 0x12000, scoped, tag = 'internal scratch']
  %s0 = inlined_call_operand.vmem [shape: bf16[2,16,48], index: 0, kind: input, shape index: {}]
  %s1 = inlined_call_operand.vmem [shape: bf16[48,32], index: 1, kind: input, shape index: {}]
  %s2 = inlined_call_operand.vmem [shape: f32[1,32], index: 2, kind: input, shape index: {}]
  %s3 = inlined_call_operand.vmem [shape: f32[16,32], index: 3, kind: input, shape index: {}]
  %s4 = inlined_call_operand.hbm [shape: f32[2,16,32], index: 4, kind: output, shape index: {}]
  %s5 = sld [smem:[#allocation0]]
  $region49: #{tpu_custom_call.1} parent=0
    _
  %s7 = ssub.s32 1, %s5
  %s8 = scalar_select 0, %s7, %s5
  $region1: #{tpu_custom_call.1} parent=0
    #allocation2 [shape = 'u8[16384]{0}', space=vmem, size = 0x4000, scoped, tag = 'output window, operand 0']
    #allocation3 [shape = 's32[2]{0}', space=sflag, size = 0x8, scoped, tag = 'scoped memory for tpu_custom_call.1']
    %9 = vsyncpa [#allocation3], 0
    %s10 = scalar_lea.sflag [#allocation3], 1
    %11 = vsyncpa %s10, 0
    loop: start=0, step=1, limit=4
    $region2: #{tpu_custom_call.1} parent=1 // loop_pre_header
      _
    $region3: #{tpu_custom_call.1} parent=1 // loop_header
      %s13 = sphi 0, %s17
      %p14 = scmp.ge.s32.totalorder %s13, 4
      %s20 = sphi 0, %s32
      %s21 = sphi 0, %s28
      %s22 = sphi 0, %s20
      %s23 = sphi 0, %s21
      %s24 = sphi 0, %s22
      %s25 = sphi 0, %s23
      %s37 = sphi 0, %s39
      %s40 = sphi 0, %s37
      %s41 = sphi 0, %s40
      %s57 = sphi 0, %s41
      %s61 = sphi 0, %s61
      %s63 = sphi 0, %s61
      %s64 = sphi 0, %s63
      %s78 = sphi 0, %s64
      %s82 = sphi 0, %s82
      %s84 = sphi 0, %s82
      %s85 = sphi 0, %s84
      %s99 = sphi 0, %s85
      %s105 = sphi 0, %s107
      %s108 = sphi 0, %s105
      %s109 = sphi 0, %s108
      %s125 = sphi 0, %s109
      %s133 = sphi 0, %s135
      %s136 = sphi 0, %s133
      %s137 = sphi 0, %s136
      %s153 = sphi 0, %s137
    $region4: #{tpu_custom_call.1} parent=1 // loop_header_branch
      %16 = sbr.rel (%p14) target = $region8
    $region5: #{tpu_custom_call.1} parent=1 // loop_body
      %s18 = ssub.s32 %s13, 1
      %s19 = ssub.s32 %s13, 2
      %s26 = sadd.s32 1, %s21
      %p27 = scmp.ge.s32.totalorder %s26, 1
      %s28 = scalar_select %p27, 0, %s26
      %s29 = sadd.s32 1, %s20
      %s30 = scalar_select %p27, %s29, %s20
      %p31 = scmp.ge.s32.totalorder %s30, 2
      %s32 = scalar_select %p31, 0, %s30
      %s33 = ssub.s32 %s20, %s32
      %s34 = ssub.s32 %s21, %s28
      %s35 = sor.u32 %s33, %s34
      %p36 = scmp.eq.s32.totalorder %s35, 0
      %s38 = sadd.s32 %s37, 1
      %s39 = scalar_select %p36, %s37, %s38
      %p42 = pneg %p36
      %p43 = scmp.eq.s32.totalorder %s13, 1
      %p44 = por %p42, %p43
      %p45 = scmp.ne.s32.totalorder %s37, %s40
      %p46 = scmp.eq.s32.totalorder %s13, 0
      %p47 = por %p45, %p46
      %p48 = scmp.ne.s32.totalorder %s37, %s40
      %p49 = scmp.eq.s32.totalorder %s18, 1
      %p50 = por %p48, %p49
      %p51 = scmp.ne.s32.totalorder %s40, %s41
      %p52 = scmp.eq.s32.totalorder %s18, 0
      %p53 = por %p51, %p52
      %p54 = scmp.ne.s32.totalorder %s40, %s41
      %p55 = scmp.eq.s32.totalorder %s19, 1
      %p56 = por %p54, %p55
      %p58 = scmp.ne.s32.totalorder %s41, %s57
      %p59 = scmp.eq.s32.totalorder %s19, 0
      %p60 = por %p58, %p59
      %s62 = sadd.s32 %s61, 1
      %p65 = scmp.eq.s32.totalorder %s13, 1
      %p66 = scmp.ne.s32.totalorder %s61, %s63
      %p67 = scmp.eq.s32.totalorder %s13, 0
      %p68 = por %p66, %p67
      %p69 = scmp.ne.s32.totalorder %s61, %s63
      %p70 = scmp.eq.s32.totalorder %s18, 1
      %p71 = por %p69, %p70
      %p72 = scmp.ne.s32.totalorder %s63, %s64
      %p73 = scmp.eq.s32.totalorder %s18, 0
      %p74 = por %p72, %p73
      %p75 = scmp.ne.s32.totalorder %s63, %s64
      %p76 = scmp.eq.s32.totalorder %s19, 1
      %p77 = por %p75, %p76
      %p79 = scmp.ne.s32.totalorder %s64, %s78
      %p80 = scmp.eq.s32.totalorder %s19, 0
      %p81 = por %p79, %p80
      %s83 = sadd.s32 %s82, 1
      %p86 = scmp.eq.s32.totalorder %s13, 1
      %p87 = scmp.ne.s32.totalorder %s82, %s84
      %p88 = scmp.eq.s32.totalorder %s13, 0
      %p89 = por %p87, %p88
      %p90 = scmp.ne.s32.totalorder %s82, %s84
      %p91 = scmp.eq.s32.totalorder %s18, 1
      %p92 = por %p90, %p91
      %p93 = scmp.ne.s32.totalorder %s84, %s85
      %p94 = scmp.eq.s32.totalorder %s18, 0
      %p95 = por %p93, %p94
      %p96 = scmp.ne.s32.totalorder %s84, %s85
      %p97 = scmp.eq.s32.totalorder %s19, 1
      %p98 = por %p96, %p97
      %p100 = scmp.ne.s32.totalorder %s85, %s99
      %p101 = scmp.eq.s32.totalorder %s19, 0
      %p102 = por %p100, %p101
      %s103 = ssub.s32 %s21, %s28
      %p104 = scmp.eq.s32.totalorder %s103, 0
      %s106 = sadd.s32 %s105, 1
      %s107 = scalar_select %p104, %s105, %s106
      %p110 = pneg %p104
      %p111 = scmp.eq.s32.totalorder %s13, 1
      %p112 = por %p110, %p111
      %p113 = scmp.ne.s32.totalorder %s105, %s108
      %p114 = scmp.eq.s32.totalorder %s13, 0
      %p115 = por %p113, %p114
      %p116 = scmp.ne.s32.totalorder %s105, %s108
      %p117 = scmp.eq.s32.totalorder %s18, 1
      %p118 = por %p116, %p117
      %p119 = scmp.ne.s32.totalorder %s108, %s109
      %p120 = scmp.eq.s32.totalorder %s18, 0
      %p121 = por %p119, %p120
      %p122 = scmp.ne.s32.totalorder %s108, %s109
      %p123 = scmp.eq.s32.totalorder %s19, 1
      %p124 = por %p122, %p123
      %p126 = scmp.ne.s32.totalorder %s109, %s125
      %p127 = scmp.eq.s32.totalorder %s19, 0
      %p128 = por %p126, %p127
      %s129 = ssub.s32 %s20, %s32
      %s130 = ssub.s32 %s21, %s28
      %s131 = sor.u32 %s129, %s130
      %p132 = scmp.eq.s32.totalorder %s131, 0
      %s134 = sadd.s32 %s133, 1
      %s135 = scalar_select %p132, %s133, %s134
      %p138 = pneg %p132
      %p139 = scmp.eq.s32.totalorder %s13, 1
      %p140 = por %p138, %p139
      %p141 = scmp.ne.s32.totalorder %s133, %s136
      %p142 = scmp.eq.s32.totalorder %s13, 0
      %p143 = por %p141, %p142
      %p144 = scmp.ne.s32.totalorder %s133, %s136
      %p145 = scmp.eq.s32.totalorder %s18, 1
      %p146 = por %p144, %p145
      %p147 = scmp.ne.s32.totalorder %s136, %s137
      %p148 = scmp.eq.s32.totalorder %s18, 0
      %p149 = por %p147, %p148
      %p150 = scmp.ne.s32.totalorder %s136, %s137
      %p151 = scmp.eq.s32.totalorder %s19, 1
      %p152 = por %p150, %p151
      %p154 = scmp.ne.s32.totalorder %s137, %s153
      %p155 = scmp.eq.s32.totalorder %s19, 0
      %p156 = por %p154, %p155
      %p157 = scmp.le.s32.totalorder 1, %s13
      %p158 = scmp.lt.s32.totalorder %s13, 3
      %p159 = pnand %p157, %p158
      %p160 = pneg %p159
      // Predicated region
      $region9: #{tpu_custom_call.1} parent=5 // pred_check
        _
      $region10: #{tpu_custom_call.1} parent=5 // pred_check_branch
        %162 = sbr.rel (%p159) target = $region12
      $region11: #{tpu_custom_call.1} parent=5 // pred_region
        %s163 = ssub.s32 %s13, 1
        // Predicated region
        $region13: #{tpu_custom_call.1} parent=11 // pred_check
          %p164 = pneg %p74
        $region14: #{tpu_custom_call.1} parent=11 // pred_check_branch
          %166 = sbr.rel (%p164) target = $region16
        $region15: #{tpu_custom_call.1} parent=11 // pred_region
          _
        $region16: #{tpu_custom_call.1} parent=11 // pred_fallthru
          _
        // Predicated region
        $region17: #{tpu_custom_call.1} parent=11 // pred_check
          %p167 = pneg %p95
        $region18: #{tpu_custom_call.1} parent=11 // pred_check_branch
          %169 = sbr.rel (%p167) target = $region20
        $region19: #{tpu_custom_call.1} parent=11 // pred_region
          _
        $region20: #{tpu_custom_call.1} parent=11 // pred_fallthru
          _
        // Predicated region
        $region21: #{tpu_custom_call.1} parent=11 // pred_check
          %p170 = pneg %p121
        $region22: #{tpu_custom_call.1} parent=11 // pred_check_branch
          %172 = sbr.rel (%p170) target = $region24
        $region23: #{tpu_custom_call.1} parent=11 // pred_region
          %s173 = smul.u32 2, %s23
          %p174 = scmp.lt.s32.totalorder %s173, 1
          %s175 = scalar_select %p174, %s173, 1
          %s176 = smul.addr %s175, 8
          %s177 = scalar_lea.vmem %s3, %s176
          %s178 = smul.u32 2, %s23
        $region24: #{tpu_custom_call.1} parent=11 // pred_fallthru
          _
      $region12: #{tpu_custom_call.1} parent=5 // pred_fallthru
        _
      %p179 = scmp.lt.s32.totalorder %s13, 2
      // Predicated region
      $region25: #{tpu_custom_call.1} parent=5 // pred_check
        %p180 = pneg %p179
      $region26: #{tpu_custom_call.1} parent=5 // pred_check_branch
        %182 = sbr.rel (%p180) target = $region28
      $region27: #{tpu_custom_call.1} parent=5 // pred_region
        // Predicated region
        $region29: #{tpu_custom_call.1} parent=27 // pred_check
          %p183 = pneg %p47
        $region30: #{tpu_custom_call.1} parent=27 // pred_check_branch
          %185 = sbr.rel (%p183) target = $region32
        $region31: #{tpu_custom_call.1} parent=27 // pred_region
          %s186 = smul.u32 2, %s21
          %p187 = scmp.lt.s32.totalorder %s20, 1
          %s188 = scalar_select %p187, %s20, 1
          %p189 = scmp.lt.s32.totalorder %s186, 1
          %s190 = scalar_select %p189, %s186, 1
          %s191 = smul.addr %s188, 2
          %s192 = sadd.s32 %s190, %s191
          %s193 = smul.addr %s192, 4
          %s194 = scalar_lea.vmem %s0, %s193
          %s195 = smul.u32 2, %s21
        $region32: #{tpu_custom_call.1} parent=27 // pred_fallthru
          _
      $region28: #{tpu_custom_call.1} parent=5 // pred_fallthru
        _
      %p196 = scmp.le.s32.totalorder 1, %s13
      %p197 = scmp.lt.s32.totalorder %s13, 3
      %p198 = pnand %p196, %p197
      %p199 = pneg %p198
      // Predicated region
      $region33: #{tpu_custom_call.1} parent=5 // pred_check
        _
      $region34: #{tpu_custom_call.1} parent=5 // pred_check_branch
        %201 = sbr.rel (%p198) target = $region36
      $region35: #{tpu_custom_call.1} parent=5 // pred_region
        %s202 = ssub.s32 %s13, 1
        %s203 = smul.u32 2, %s23
        %p204 = scmp.lt.s32.totalorder %s22, 1
        %s205 = scalar_select %p204, %s22, 1
        %p206 = scmp.lt.s32.totalorder %s203, 1
        %s207 = scalar_select %p206, %s203, 1
        %s208 = smul.addr %s205, 2
        %s209 = sadd.s32 %s207, %s208
        %s210 = smul.addr %s209, 4
        %s211 = scalar_lea.vmem %s0, %s210
        %p212 = pneg %p53
        %p213 = pneg %p50
        %p214 = pneg %p74
        %p215 = pneg %p71
        %p216 = pneg %p95
        %p217 = pneg %p92
        %s218 = smul.u32 2, %s23
        %p219 = scmp.lt.s32.totalorder %s218, 1
        %s220 = scalar_select %p219, %s218, 1
        %s221 = smul.addr %s220, 8
        %s222 = scalar_lea.vmem %s3, %s221
        %p223 = pneg %p121
        %p224 = pneg %p118
        %p225 = pneg %p149
        %p226 = pneg %p146
        %s227 = sand.u32 %s136, 1
        %s228 = scalar_lea.sflag [#allocation3], %s227
        %s229 = sand.u32 %s136, 1
        %s230 = smul.addr %s229, 16
        %s231 = scalar_lea.vmem [#allocation2], %s230
        %s232 = smul.u32 2, %s23
        %p233 = scmp.lt.s32.totalorder %s22, 1
        %s234 = scalar_select %p233, %s22, 1
        %p235 = scmp.lt.s32.totalorder %s232, 1
        %s236 = scalar_select %p235, %s232, 1
        %s237 = smul.addr %s234, 2
        %s238 = sadd.s32 %s236, %s237
        %s239 = smul.addr %s238, 4
        %s240 = scalar_lea.vmem %s0, %s239
        %s241 = smul.u32 2, %s23
        %s242 = smul.u32 2, %s23
        %p243 = scmp.lt.s32.totalorder %s242, 1
        %s244 = scalar_select %p243, %s242, 1
        %s245 = smul.addr %s244, 8
        %s246 = scalar_lea.vmem %s3, %s245
        %s247 = smul.u32 2, %s23
        %s248 = smul.u32 2, %s23
        %v250 = vld [vmem:[%s240] sm:$0xf]
        %v251 = vld [vmem:[%s240 + $0x4] sm:$0xf]
        %v252 = vld [vmem:[%s1] sm:$0xf]
        %v253 = vld [vmem:[%s1 + $0x4] sm:$0xf]
        %v254 = vld [vmem:[%s1 + $0x8] sm:$0xf]
        %v255 = vld [vmem:[%s1 + $0xc] sm:$0xf]
        %v256 = vld [vmem:[%s1 + $0x10] sm:$0xf]
        %v257 = vld [vmem:[%s1 + $0x14] sm:$0xf]
        %v258 = vld [vmem:[%s2] sm:$0x1]
        %v260 = vlaneseq
        %v261 = vshrl.u32 %v260, 7
        %v262 = vsub.s32 0, %v261
        %v263 = vrot.slane %v258, %v262
        %v267 = vunpack.c.l.b16 %v250
        %v268 = vunpack.c.l.b16 %v251
        %v269 = vpack.c.b16 %v268, %v267
        %v276 = vunpack.c.l.b16 %v252
        %v277 = vunpack.c.l.b16 %v253
        %v278 = vunpack.c.l.b16 %v254
        %v279 = vunpack.c.l.b16 %v255
        %v280 = vunpack.c.l.b16 %v256
        %v281 = vunpack.c.l.b16 %v257
        %v282 = vpack.c.b16 %v277, %v276
        %v283 = vpack.c.b16 %v279, %v278
        %v284 = vpack.c.b16 %v281, %v280
        %vm288 = vcmask 392192
        %v290 = vsel %vm288, %v269, 0
        %292 = vmatprep.subr.bf16.mxu0 0
        %293 = vmatpush1.bf16.msra.mxu0 %v282
        %294 = vmatprep.subr.bf16.mxu0 0
        %295 = vmatpush1.bf16.msra.mxu0 %v283
        %296 = vmatprep.subr.bf16.mxu0 0
        %297 = vmatpush1.bf16.msra.mxu0 %v284
        %298 = vmatprep.subr.bf16.mxu0 0
        %299 = vmatpush1.bf16.msra.mxu0 0
        %300 = vmatprep.subr.bf16.mxu0 0
        %301 = vmatpush1.bf16.msra.mxu0 0
        %302 = vmatprep.subr.bf16.mxu0 0
        %303 = vmatpush1.bf16.msra.mxu0 0
        %304 = vmatprep.subr.bf16.mxu0 0
        %305 = vmatpush1.bf16.msra.mxu0 0
        %306 = vmatprep.subr.bf16.mxu0 0
        %307 = vmatpush1.bf16.msra.mxu0 0
        %308 = vmatprep.subr.bf16.mxu0 0
        %309 = vmatpush1.bf16.msra.mxu0 0
        %310 = vmatprep.subr.bf16.mxu0 0
        %311 = vmatpush1.bf16.msra.mxu0 0
        %312 = vmatprep.subr.bf16.mxu0 0
        %313 = vmatpush1.bf16.msra.mxu0 0
        %314 = vmatprep.subr.bf16.mxu0 0
        %315 = vmatpush1.bf16.msra.mxu0 0
        %316 = vmatprep.subr.bf16.mxu0 0
        %317 = vmatpush1.bf16.msra.mxu0 0
        %318 = vmatprep.subr.bf16.mxu0 0
        %319 = vmatpush1.bf16.msra.mxu0 0
        %320 = vmatprep.subr.bf16.mxu0 0
        %321 = vmatpush1.bf16.msra.mxu0 0
        %322 = vmatprep.subr.bf16.mxu0 0
        %323 = vmatpush1.bf16.msra.mxu0 0
        %324 = vmatprep.mubr.bf16.mxu0 0
        %325 = vmatmul.mubr.bf16.gmra.mrb[0].mxu0 %v290
        %v326 = vpop.f32.mrb[0].mxu0
        %v327 = vadd.f32 %v263, %v326
        %v328 = vpop.f32.mrb[0].mxu0
        %v329 = vpop.f32.mrb[0].mxu0
        %v330 = vadd.f32 %v263, %v329
        %v331 = vpop.f32.mrb[0].mxu0
        %332 = vdwg.mxu0
        %v333 = vld [vmem:[%s246] sm:$0xff]
        %v334 = vld [vmem:[%s246 + $0x8] sm:$0xff]
        %v335 = vadd.f32 %v327, %v333
        %v336 = vadd.f32 %v330, %v334
        %vm337 = vcmask 261120
        %338 = vst.msk [vmem:[%s231] sm:$0xff] %vm337, %v335
        %339 = vst.msk [vmem:[%s231 + $0x8] sm:$0xff] %vm337, %v336
        %s340 = sand.u32 %s136, 1
        %s341 = scalar_lea.sflag [#allocation3], %s340
        %s342 = sand.u32 %s136, 1
        %s343 = smul.addr %s342, 16
        %s344 = scalar_lea.vmem [#allocation2], %s343
        // Predicated region
        $region37: #{tpu_custom_call.1} parent=35 // pred_check
          %p345 = pneg %p146
        $region38: #{tpu_custom_call.1} parent=35 // pred_check_branch
          %347 = sbr.rel (%p345) target = $region40
        $region39: #{tpu_custom_call.1} parent=35 // pred_region
          %s348 = smul.u32 2, %s23
          %s350 = ssub.s32 256, 256
          %351 = vsyncadd %s341, %s350
          %s352 = smul.addr %s22, 2
          %s353 = sadd.s32 %s348, %s352
          %s354 = smul.addr %s353, 128
          %s355 = scalar_lea.hbm %s4, %s354
          %s356 = sshll.u32 %s344, 4
          %s357 = int_to_ptr.vmem [resolvable:$true] %s356
          %362 = dma.vmem_to_hbm [thread:$0]  %s357, 256, %s355, %s341, 128, 128, 8
        $region40: #{tpu_custom_call.1} parent=35 // pred_fallthru
          _
      $region36: #{tpu_custom_call.1} parent=5 // pred_fallthru
        _
      %p363 = scmp.le.s32.totalorder 2, %s13
      // Predicated region
      $region41: #{tpu_custom_call.1} parent=5 // pred_check
        %p364 = pneg %p363
      $region42: #{tpu_custom_call.1} parent=5 // pred_check_branch
        %366 = sbr.rel (%p364) target = $region44
      $region43: #{tpu_custom_call.1} parent=5 // pred_region
        %s367 = ssub.s32 %s13, 2
        // Predicated region
        $region45: #{tpu_custom_call.1} parent=43 // pred_check
          %p368 = pneg %p152
        $region46: #{tpu_custom_call.1} parent=43 // pred_check_branch
          %370 = sbr.rel (%p368) target = $region48
        $region47: #{tpu_custom_call.1} parent=43 // pred_region
          %s371 = sand.u32 %s137, 1
          %s372 = scalar_lea.sflag [#allocation3], %s371
          %s373 = sand.u32 %s137, 1
          %s374 = smul.addr %s373, 16
          %s375 = scalar_lea.vmem [#allocation2], %s374
          %376 = dma.done %s372, 256
        $region48: #{tpu_custom_call.1} parent=43 // pred_fallthru
          _
      $region44: #{tpu_custom_call.1} parent=5 // pred_fallthru
        _
    $region6: #{tpu_custom_call.1} parent=1 // loop_footer
      %s17 = sadd.s32 1, %s13
    $region7: #{tpu_custom_call.1} parent=1 // loop_footer_branch
      %12 = sbr.rel target = $region3
    $region8: #{tpu_custom_call.1} parent=1 // loop_exit
      _
    %377 = vsyncpa [#allocation3], 1
    %s378 = scalar_lea.sflag [#allocation3], 1
    %379 = vsyncpa %s378, 1

</llo_original>
